<compile_context>
chip_gen: v7x
topology: tpu7x:2x2x1
jax: 0.10.0
libtpu: 0.0.40
codegen_flags: <defaults>
</compile_context>

<pallas_src>
import jax
import jax.numpy as jnp
from jax.experimental import pallas as pl
from jax.experimental.pallas import tpu as pltpu


def _object_head_kernel(x_ref, w_ref, b_ref, o_ref):
    # x_ref: (TM, H) VMEM, w_ref: (1, H) VMEM, b_ref: (1,) SMEM, o_ref: (1, TM)
    x = x_ref[...].astype(jnp.float32)           # upcast (v5e VPU has no bf16)
    w = w_ref[...].astype(jnp.float32)           # (1, H) broadcasts over rows
    prod = x * w                                 # VPU
    h = prod.shape[-1]
    if h > 128 and h % 128 == 0:
        # Pre-accumulate the H/128 lane chunks with VPU adds (static
        # 128-aligned lane slices are free), leaving a single XLU cross-lane
        # reduce below instead of a rotate/add tree per input vreg.
        acc = prod[:, :128]
        for c in range(1, h // 128):
            acc = acc + prod[:, c * 128:(c + 1) * 128]
    else:
        acc = prod
    logits = jnp.sum(acc, axis=-1)               # (TM,) one cross-lane reduce
    logits = logits.reshape(1, -1) + b_ref[0]    # lane-dense row + SMEM bias
    o_ref[...] = jax.nn.sigmoid(logits).astype(o_ref.dtype)


def _round_up(v, m):
    return ((v + m - 1) // m) * m


def object_head_forward(x, weight, bias, *, target_block_bytes=4 * 1024 * 1024):
    """x: (B, Q, H); weight: torch Linear layout (1, H); bias: (1,)."""
    B, Q, H = x.shape
    M = B * Q
    x_flat = x.reshape(M, H)
    w_row = weight.reshape(1, H)
    b = bias.reshape(1).astype(jnp.float32)

    itemsize = jnp.dtype(x.dtype).itemsize
    sublane = max(8, 32 // itemsize)                    # 8 f32, 16 bf16, 32 int8
    budget_rows = max(sublane, target_block_bytes // (H * itemsize))

    if budget_rows >= M:
        # Single grid step; tile just needs sublane alignment (may overhang M,
        # Pallas clips the input DMA).
        tm = _round_up(M, sublane)
    else:
        # Multiple steps: lane-align tm (128) so the (1, tm) output block is
        # legal; prefer an even step count so the "parallel" axis splits
        # evenly across both TensorCores on v7x.
        tm = max(128, (budget_rows // 128) * 128)
        nb = pl.cdiv(M, tm)
        if nb > 1 and nb % 2 == 1:
            tm_even = max(128, _round_up(pl.cdiv(M, nb + 1), 128))
            if pl.cdiv(M, tm_even) % 2 == 0:
                tm = tm_even
    num_blocks = pl.cdiv(M, tm)
    m_pad = num_blocks * tm                              # output-only padding

    cost = pl.CostEstimate(
        flops=2 * M * H,
        transcendentals=M,
        bytes_accessed=M * H * itemsize + m_pad * itemsize + H * itemsize + 4,
    )

    out_flat = pl.pallas_call(
        _object_head_kernel,
        out_shape=jax.ShapeDtypeStruct((1, m_pad), x.dtype),
        grid=(num_blocks,),
        in_specs=[
            pl.BlockSpec((tm, H), lambda i: (i, 0)),               # x row tile
            pl.BlockSpec((1, H), lambda i: (0, 0)),                # weight (resident)
            pl.BlockSpec(memory_space=pltpu.MemorySpace.SMEM),     # bias scalar
        ],
        out_specs=pl.BlockSpec((1, tm), lambda i: (0, i)),         # lane-dense out
        compiler_params=pltpu.CompilerParams(
            dimension_semantics=("parallel",),
            vmem_limit_bytes=32 * 1024 * 1024,
        ),
        cost_estimate=cost,
    )(x_flat, w_row, b)

    # unflatten(0, (B, Q)) -> (B, Q, 1), dropping the output-slab padding.
    return out_flat.reshape(m_pad)[:M].reshape(B, Q, 1)


if __name__ == "__main__":
    key = jax.random.PRNGKey(0)
    kx, kw, kb, kx2, kw2, kb2 = jax.random.split(key, 6)

    # ---- 1) Module-spec shapes with ObjectHead's zero init ----------------
    B, Q, H = 2, 8, 32  # batch, num queries, hidden_dim
    x = jax.random.normal(kx, (B, Q, H), dtype=jnp.float32)
    weight0 = jnp.zeros((1, H), dtype=jnp.float32)  # torch Linear: (out=1, in=H)
    bias0 = jnp.zeros((1,), dtype=jnp.float32)

    out0 = jax.block_until_ready(object_head_forward(x, weight0, bias0))
    ref0 = jax.nn.sigmoid(x.reshape(B * Q, H) @ weight0.T + bias0).reshape(B, Q, 1)
    assert out0.shape == (B, Q, 1), out0.shape
    assert jnp.allclose(out0, ref0, atol=1e-6), "mismatch vs zero-init reference"

    # ---- 2) Non-trivial weights -------------------------------------------
    weight1 = 0.1 * jax.random.normal(kw, (1, H), dtype=jnp.float32)
    bias1 = 0.1 * jax.random.normal(kb, (1,), dtype=jnp.float32)
    out1 = jax.block_until_ready(object_head_forward(x, weight1, bias1))
    ref1 = jax.nn.sigmoid(x.reshape(B * Q, H) @ weight1.T + bias1).reshape(B, Q, 1)
    assert jnp.allclose(out1, ref1, atol=1e-5, rtol=1e-5), "mismatch vs reference"

    # ---- 3) Multi-block grid with a partial final block (M % tm != 0) -----
    B2, Q2, H2 = 2, 300, 256            # Deformable-DETR-like: M=600, H=256
    x2 = jax.random.normal(kx2, (B2, Q2, H2), dtype=jnp.float32)
    weight2 = 0.05 * jax.random.normal(kw2, (1, H2), dtype=jnp.float32)
    bias2 = 0.05 * jax.random.normal(kb2, (1,), dtype=jnp.float32)
    out2 = jax.block_until_ready(
        object_head_forward(x2, weight2, bias2, target_block_bytes=128 * H2 * 4))
    ref2 = jax.nn.sigmoid(
        x2.reshape(B2 * Q2, H2) @ weight2.T + bias2).reshape(B2, Q2, 1)
    assert out2.shape == (B2, Q2, 1), out2.shape
    assert jnp.allclose(out2, ref2, atol=1e-5, rtol=1e-5), "mismatch (partial block)"

    # ---- 4) bf16 activations / weights (halved HBM traffic path) ----------
    xb = x.astype(jnp.bfloat16)
    wb = weight1.astype(jnp.bfloat16)
    bb = bias1.astype(jnp.bfloat16)
    out3 = jax.block_until_ready(object_head_forward(xb, wb, bb))
    ref3 = jax.nn.sigmoid(
        xb.astype(jnp.float32).reshape(B * Q, H)
        @ wb.astype(jnp.float32).T + bb.astype(jnp.float32)).reshape(B, Q, 1)
    assert out3.shape == (B, Q, 1)
    assert jnp.allclose(out3.astype(jnp.float32), ref3, atol=2e-2), "bf16 mismatch"

    print("KERNEL_OK")
</pallas_src>

<mosaic_0001>
module attributes {stable_mosaic.version = 11 : i64} {
  func.func @_object_head_kernel(%arg0: i32, %arg1: memref<16x32xf32, #tpu.memory_space<vmem>>, %arg2: memref<1x32xf32, #tpu.memory_space<vmem>>, %arg3: memref<1xf32, #tpu.memory_space<smem>>, %arg4: memref<1x16xf32, #tpu.memory_space<vmem>>) attributes {dimension_semantics = [#tpu.dimension_semantics<parallel>], iteration_bounds = array<i64: 1>, scalar_prefetch = 0 : i64, scratch_operands = 0 : i64, tpu.core_type = #tpu.core_type<tc>, window_params = [{transform_indices = @transform_0, window_bounds = array<i64: 16, 32>}, {pipeline_mode = #tpu.pipeline_mode<synchronous>, transform_indices = @transform_1, window_bounds = array<i64: 1, 32>}, {transform_indices = @transform_2, window_bounds = array<i64: 1>}, {transform_indices = @transform_3, window_bounds = array<i64: 1, 16>}]} {
    %c0 = arith.constant 0 : index
    %c0_0 = arith.constant 0 : index
    %0 = vector.load %arg1[%c0, %c0_0] : memref<16x32xf32, #tpu.memory_space<vmem>>, vector<16x32xf32>
    %c0_1 = arith.constant 0 : index
    %c0_2 = arith.constant 0 : index
    %1 = vector.load %arg2[%c0_1, %c0_2] : memref<1x32xf32, #tpu.memory_space<vmem>>, vector<1x32xf32>
    %2 = vector.broadcast %1 : vector<1x32xf32> to vector<16x32xf32>
    %3 = arith.mulf %0, %2 : vector<16x32xf32>
    %cst = arith.constant dense<0.000000e+00> : vector<16xf32>
    %4 = vector.multi_reduction <add>, %3, %cst [1] : vector<16x32xf32> to vector<16xf32>
    %5 = vector.shape_cast %4 : vector<16xf32> to vector<1x16xf32>
    %c0_3 = arith.constant 0 : index
    %6 = memref.load %arg3[%c0_3] : memref<1xf32, #tpu.memory_space<smem>>
    %7 = vector.broadcast %6 : f32 to vector<1x16xf32>
    %8 = arith.addf %5, %7 : vector<1x16xf32>
    %9 = arith.negf %8 : vector<1x16xf32>
    %10 = math.exp %9 : vector<1x16xf32>
    %cst_4 = arith.constant 1.000000e+00 : f32
    %11 = vector.broadcast %cst_4 : f32 to vector<1x16xf32>
    %12 = arith.addf %11, %10 : vector<1x16xf32>
    %13 = arith.divf %11, %12 : vector<1x16xf32>
    %c0_5 = arith.constant 0 : index
    %c0_6 = arith.constant 0 : index
    %14 = vector.load %arg4[%c0_5, %c0_6] : memref<1x16xf32, #tpu.memory_space<vmem>>, vector<1x16xf32>
    tpu.vector_store %arg4[%c0_5, %c0_6], %13 {strides = array<i32>} : memref<1x16xf32, #tpu.memory_space<vmem>>, vector<1x16xf32>,
    return
  }
  func.func @transform_0(%arg0: i32) -> (i32, i32) {
    %c0_i32 = arith.constant 0 : i32
    %c0_i32_0 = arith.constant 0 : i32
    return %arg0, %c0_i32 : i32, i32
  }
  func.func @transform_1(%arg0: i32) -> (i32, i32) {
    %c0_i32 = arith.constant 0 : i32
    %c0_i32_0 = arith.constant 0 : i32
    %c0_i32_1 = arith.constant 0 : i32
    return %c0_i32, %c0_i32_0 : i32, i32
  }
  func.func @transform_2(%arg0: i32) -> i32 {
    %c0_i32 = arith.constant 0 : i32
    %c0_i32_0 = arith.constant 0 : i32
    return %c0_i32 : i32
  }
  func.func @transform_3(%arg0: i32) -> (i32, i32) {
    %c0_i32 = arith.constant 0 : i32
    %c0_i32_0 = arith.constant 0 : i32
    return %c0_i32, %arg0 : i32, i32
  }
}

</mosaic_0001>

<llo_original>
// kernel: tpu_custom_call.1
$region0: #{tpu_custom_call.1}
  #allocation0 [shape = 'u32[]', space=smem, size = 0x4, offset = 0x4, fixed_abs, tag = 'smem constant byte address 0x4 - core index']
  #allocation1 [shape = 'u32[144,128]{1,0:T(1,128)}', space=vmem, size = 0x12000, scoped, tag = 'internal scratch']
  #allocation2 [shape = 'f32[1]{0:T(128)S(6)}', space=smem, size = 0x200, scoped, tag = 'scoped memory for tpu_custom_call.1']
  %s0 = inlined_call_operand.hbm [shape: f32[16,32], index: 0, kind: input, shape index: {}]
  %s1 = inlined_call_operand.vmem [shape: f32[1,32], index: 1, kind: input, shape index: {}]
  %s2 = inlined_call_operand.<no memory space> [shape: f32[1], index: 2, kind: input, shape index: {}]
  %s3 = inlined_call_operand.hbm [shape: f32[1,16], index: 3, kind: output, shape index: {}]
  %s4 = sld [smem:[#allocation0]]
  $region26: #{tpu_custom_call.1} parent=0
    _
  %s6 = ssub.s32 1, %s4
  %s7 = scalar_select 0, %s6, %s4
  %8 = sst [smem:[#allocation2]] %s2
  $region1: #{tpu_custom_call.1} parent=0
    #allocation3 [shape = 'u8[8192]{0}', space=vmem, size = 0x2000, scoped, tag = 'input window, operand 0, single buffered']
    #allocation4 [shape = 's32[1]{0}', space=sflag, size = 0x4, scoped, tag = 'scoped memory for tpu_custom_call.1']
    #allocation5 [shape = 's32[1]{0}', space=sflag, size = 0x4, scoped, tag = 'scoped memory for tpu_custom_call.1']
    #allocation6 [shape = 'u8[512]{0}', space=vmem, size = 0x400, scoped, tag = 'output window, operand 0, single buffered']
    %9 = vsyncpa [#allocation4], 0
    %10 = vsyncpa [#allocation5], 0
    // Predicated region
    $region2: #{tpu_custom_call.1} parent=1 // pred_check
      _
    $region3: #{tpu_custom_call.1} parent=1 // pred_check_branch
      %12 = sbr.rel (0) target = $region5
    $region4: #{tpu_custom_call.1} parent=1 // pred_region
      %s14 = ssub.s32 256, 256
      %15 = vsyncadd [#allocation4], %s14
      %s16 = sshll.u32 [#allocation3], 4
      %s17 = int_to_ptr.vmem [resolvable:$true] %s16
      %22 = dma.hbm_to_vmem [thread:$0]  %s0, 256, %s17, [#allocation4], 128, 128, 8
    $region5: #{tpu_custom_call.1} parent=1 // pred_fallthru
      _
    // Predicated region
    $region6: #{tpu_custom_call.1} parent=1 // pred_check
      _
    $region7: #{tpu_custom_call.1} parent=1 // pred_check_branch
      %24 = sbr.rel (0) target = $region9
    $region8: #{tpu_custom_call.1} parent=1 // pred_region
      _
    $region9: #{tpu_custom_call.1} parent=1 // pred_fallthru
      _
    // Predicated region
    $region10: #{tpu_custom_call.1} parent=1 // pred_check
      _
    $region11: #{tpu_custom_call.1} parent=1 // pred_check_branch
      %26 = sbr.rel (0) target = $region13
    $region12: #{tpu_custom_call.1} parent=1 // pred_region
      _
    $region13: #{tpu_custom_call.1} parent=1 // pred_fallthru
      _
    // Predicated region
    $region14: #{tpu_custom_call.1} parent=1 // pred_check
      _
    $region15: #{tpu_custom_call.1} parent=1 // pred_check_branch
      %28 = sbr.rel (0) target = $region17
    $region16: #{tpu_custom_call.1} parent=1 // pred_region
      %29 = dma.done [#allocation4], 256
    $region17: #{tpu_custom_call.1} parent=1 // pred_fallthru
      _
    %v30 = vld [vmem:[#allocation3] sm:$0xff]
    %v31 = vld [vmem:[#allocation3 + $0x8] sm:$0xff]
    %v32 = vld [vmem:[%s1] sm:$0x1]
    %v34 = vlaneseq
    %v35 = vshrl.u32 %v34, 7
    %v36 = vsub.s32 0, %v35
    %v37 = vrot.slane %v32, %v36
    %v39 = vmul.f32 %v30, %v37
    %v40 = vmul.f32 %v31, %v37
    %vm41 = vcmask 261120
    %v42 = vsel %vm41, %v39, 0.0
    %43 = vadd.xlane.f32.xlu0 %v42
    %v44 = vpop.xlane.xlu0 %43
    %v45 = vsel %vm41, %v40, 0.0
    %46 = vadd.xlane.f32.xlu0 %v45
    %v47 = vpop.xlane.xlu0 %46
    %s48 = sld [smem:[#allocation2]]
    %v49 = vstv %s48
    %v50 = vadd.f32 %v44, %v49
    %v51 = vadd.f32 %v47, %v49
    %v52 = vxor.u32 %v50, 2147483648
    %v53 = vxor.u32 %v51, 2147483648
    %v54 = vmul.f32 %v52, 1.442695
    %v55 = vpow.pop %v54
    %v56 = vmul.f32 %v53, 1.442695
    %v57 = vpow.pop %v56
    %v58 = vadd.f32 %v55, 1.0
    %v59 = vadd.f32 %v57, 1.0
    %v60 = vrcp.pop %v58
    %v61 = vmul.f32 1.0, %v60
    %v62 = vrcp.pop %v59
    %v63 = vmul.f32 1.0, %v62
    %v66 = vlaneseq
    %v67 = vand.u32 %v66, 127
    %v68 = vlaneseq
    %v69 = vshrl.u32 %v68, 7
    %v70 = vsub.s32 %v67, %v69
    %v71 = vrot.slane %v61, %v70
    %v72 = vadd.s32 %v67, 4294967288
    %v73 = vlaneseq
    %v74 = vshrl.u32 %v73, 7
    %v75 = vsub.s32 %v72, %v74
    %v76 = vrot.slane %v63, %v75
    %vm77 = vcmask 130112
    %v78 = vsel %vm77, %v76, %v71
    %vm80 = vcmask 122880
    %81 = vst.msk [vmem:[#allocation6] sm:$0x1] %vm80, %v78
    // Predicated region
    $region18: #{tpu_custom_call.1} parent=1 // pred_check
      _
    $region19: #{tpu_custom_call.1} parent=1 // pred_check_branch
      %83 = sbr.rel (0) target = $region21
    $region20: #{tpu_custom_call.1} parent=1 // pred_region
      %s85 = ssub.s32 16, 16
      %86 = vsyncadd [#allocation5], %s85
      %s88 = sshll.u32 [#allocation6], 4
      %s89 = int_to_ptr.vmem [resolvable:$true] %s88
      %91 = dma.vmem_to_hbm [thread:$0]  %s89, 16, %s3, [#allocation5]
    $region21: #{tpu_custom_call.1} parent=1 // pred_fallthru
      _
    // Predicated region
    $region22: #{tpu_custom_call.1} parent=1 // pred_check
      _
    $region23: #{tpu_custom_call.1} parent=1 // pred_check_branch
      %93 = sbr.rel (0) target = $region25
    $region24: #{tpu_custom_call.1} parent=1 // pred_region
      %94 = dma.done [#allocation5], 16
    $region25: #{tpu_custom_call.1} parent=1 // pred_fallthru
      _
    %95 = vsyncpa [#allocation4], 1
    %96 = vsyncpa [#allocation5], 1

</llo_original>
